<compile_context>
chip_gen: v5e
topology: v5e:2x2
jax: 0.10.0
libtpu: 0.0.40
codegen_flags: <defaults>
</compile_context>

<pallas_src>
import jax
import jax.numpy as jnp
from jax.experimental import pallas as pl
from jax.experimental.pallas import tpu as pltpu


def _rating_regressor_kernel(u_ref, i_ref, w_ref, b_ref, o_ref):
    # u_ref, i_ref: (TM, D)   w_ref: (1, 2D)   b_ref: (1,) in SMEM   o_ref: (1, TM)
    D = u_ref.shape[-1]
    u = u_ref[...]                 # (TM, D), native dtype
    it = i_ref[...]                # (TM, D)
    wu = w_ref[:, :D]              # (1, D) lane-dense row (D is a multiple of 128)
    wi = w_ref[:, D:]              # (1, D)
    # VPU multiply-add + cross-lane (XLU) reduction, f32 accumulation.
    acc = jnp.sum(u * wu + it * wi, axis=-1, dtype=jnp.float32)   # (TM,)
    o_ref[...] = (acc + b_ref[0]).astype(o_ref.dtype)[None, :]    # (1, TM) lane-dense


def rating_regressor(user_emb, item_emb, weight, bias, *, tm_max=1024):
    """user_emb, item_emb: (B, D); weight: (1, 2D); bias: (1,). Returns (B,)."""
    B, D = user_emb.shape
    assert item_emb.shape == (B, D)
    assert weight.shape == (1, 2 * D)

    # Batch tile: round small batches up to a multiple of 8 (sublane), cap at
    # tm_max so double-buffered input tiles stay well under VMEM on all gens.
    if B <= tm_max:
        TM = max(8, pl.cdiv(B, 8) * 8)
    else:
        TM = tm_max
    num_tiles = pl.cdiv(B, TM)
    B_pad = num_tiles * TM
    if B_pad != B:
        pad = ((0, B_pad - B), (0, 0))
        user_emb = jnp.pad(user_emb, pad)
        item_emb = jnp.pad(item_emb, pad)

    out = pl.pallas_call(
        _rating_regressor_kernel,
        out_shape=jax.ShapeDtypeStruct((num_tiles, TM), jnp.float32),
        grid=(num_tiles,),
        in_specs=[
            pl.BlockSpec((TM, D), lambda i: (i, 0)),        # user_emb tile
            pl.BlockSpec((TM, D), lambda i: (i, 0)),        # item_emb tile
            pl.BlockSpec((1, 2 * D), lambda i: (0, 0)),     # full weight, pinned
            pl.BlockSpec(memory_space=pltpu.SMEM),          # bias scalar
        ],
        out_specs=pl.BlockSpec((1, TM), lambda i: (i, 0)),  # lane-dense output row
        compiler_params=pltpu.CompilerParams(
            dimension_semantics=("parallel",),              # megacore on v7x
            vmem_limit_bytes=32 * 1024 * 1024,
        ),
    )(user_emb, item_emb, weight, bias)

    return out.reshape(-1)[:B]   # squeeze(-1) + drop batch padding


if __name__ == "__main__":
    emb_dim = 384
    batch = 8

    key = jax.random.PRNGKey(0)
    k_u, k_i, k_w, k_b = jax.random.split(key, 4)

    user_emb = jax.random.normal(k_u, (batch, emb_dim), dtype=jnp.float32)
    item_emb = jax.random.normal(k_i, (batch, emb_dim), dtype=jnp.float32)

    # Deterministic parameter init, mimicking nn.Linear's U(-1/sqrt(fan_in), 1/sqrt(fan_in)).
    fan_in = 2 * emb_dim
    bound = 1.0 / (fan_in ** 0.5)
    weight = jax.random.uniform(k_w, (1, 2 * emb_dim), minval=-bound, maxval=bound,
                                dtype=jnp.float32)
    bias = jax.random.uniform(k_b, (1,), minval=-bound, maxval=bound,
                              dtype=jnp.float32)

    out = rating_regressor(user_emb, item_emb, weight, bias)
    out = jax.block_until_ready(out)

    # Pure-JAX reference check.
    x = jnp.concatenate([user_emb, item_emb], axis=1)
    ref = (x @ weight.T + bias)[:, 0]
    assert out.shape == (batch,)
    assert jnp.allclose(out, ref, atol=1e-4, rtol=1e-4)

    print("KERNEL_OK")
</pallas_src>

<mosaic_0001>
module attributes {stable_mosaic.version = 11 : i64} {
  func.func @_rating_regressor_kernel(%arg0: i32, %arg1: memref<8x384xf32, #tpu.memory_space<vmem>>, %arg2: memref<8x384xf32, #tpu.memory_space<vmem>>, %arg3: memref<1x768xf32, #tpu.memory_space<vmem>>, %arg4: memref<1xf32, #tpu.memory_space<smem>>, %arg5: memref<1x8xf32, #tpu.memory_space<vmem>>) attributes {dimension_semantics = [#tpu.dimension_semantics<parallel>], iteration_bounds = array<i64: 1>, scalar_prefetch = 0 : i64, scratch_operands = 0 : i64, tpu.core_type = #tpu.core_type<tc>, window_params = [{transform_indices = @transform_0, window_bounds = array<i64: 8, 384>}, {transform_indices = @transform_1, window_bounds = array<i64: 8, 384>}, {pipeline_mode = #tpu.pipeline_mode<synchronous>, transform_indices = @transform_2, window_bounds = array<i64: 1, 768>}, {transform_indices = @transform_3, window_bounds = array<i64: 1>}, {transform_indices = @transform_4, window_bounds = array<i64: 1, 8>}]} {
    %c0 = arith.constant 0 : index
    %c0_0 = arith.constant 0 : index
    %0 = vector.load %arg1[%c0, %c0_0] : memref<8x384xf32, #tpu.memory_space<vmem>>, vector<8x384xf32>
    %c0_1 = arith.constant 0 : index
    %c0_2 = arith.constant 0 : index
    %1 = vector.load %arg2[%c0_1, %c0_2] : memref<8x384xf32, #tpu.memory_space<vmem>>, vector<8x384xf32>
    %c0_3 = arith.constant 0 : index
    %c0_4 = arith.constant 0 : index
    %2 = vector.load %arg3[%c0_3, %c0_4] : memref<1x768xf32, #tpu.memory_space<vmem>>, vector<1x384xf32>
    %c0_5 = arith.constant 0 : index
    %c384 = arith.constant 384 : index
    %3 = vector.load %arg3[%c0_5, %c384] : memref<1x768xf32, #tpu.memory_space<vmem>>, vector<1x384xf32>
    %4 = vector.broadcast %2 : vector<1x384xf32> to vector<8x384xf32>
    %5 = arith.mulf %0, %4 : vector<8x384xf32>
    %6 = vector.broadcast %3 : vector<1x384xf32> to vector<8x384xf32>
    %7 = arith.mulf %1, %6 : vector<8x384xf32>
    %8 = arith.addf %5, %7 : vector<8x384xf32>
    %cst = arith.constant dense<0.000000e+00> : vector<8xf32>
    %9 = vector.multi_reduction <add>, %8, %cst [1] : vector<8x384xf32> to vector<8xf32>
    %c0_6 = arith.constant 0 : index
    %10 = memref.load %arg4[%c0_6] : memref<1xf32, #tpu.memory_space<smem>>
    %11 = vector.broadcast %10 : f32 to vector<8xf32>
    %12 = arith.addf %9, %11 : vector<8xf32>
    %13 = vector.shape_cast %12 : vector<8xf32> to vector<1x8xf32>
    %c0_7 = arith.constant 0 : index
    %c0_8 = arith.constant 0 : index
    %14 = vector.load %arg5[%c0_7, %c0_8] : memref<1x8xf32, #tpu.memory_space<vmem>>, vector<1x8xf32>
    tpu.vector_store %arg5[%c0_7, %c0_8], %13 {strides = array<i32>} : memref<1x8xf32, #tpu.memory_space<vmem>>, vector<1x8xf32>,
    return
  }
  func.func @transform_0(%arg0: i32) -> (i32, i32) {
    %c0_i32 = arith.constant 0 : i32
    %c0_i32_0 = arith.constant 0 : i32
    return %arg0, %c0_i32 : i32, i32
  }
  func.func @transform_1(%arg0: i32) -> (i32, i32) {
    %c0_i32 = arith.constant 0 : i32
    %c0_i32_0 = arith.constant 0 : i32
    return %arg0, %c0_i32 : i32, i32
  }
  func.func @transform_2(%arg0: i32) -> (i32, i32) {
    %c0_i32 = arith.constant 0 : i32
    %c0_i32_0 = arith.constant 0 : i32
    %c0_i32_1 = arith.constant 0 : i32
    return %c0_i32, %c0_i32_0 : i32, i32
  }
  func.func @transform_3(%arg0: i32) -> i32 {
    %c0_i32 = arith.constant 0 : i32
    %c0_i32_0 = arith.constant 0 : i32
    return %c0_i32 : i32
  }
  func.func @transform_4(%arg0: i32) -> (i32, i32) {
    %c0_i32 = arith.constant 0 : i32
    %c0_i32_0 = arith.constant 0 : i32
    return %arg0, %c0_i32 : i32, i32
  }
}

</mosaic_0001>

<llo_original>
// kernel: tpu_custom_call.1
$region0: #{tpu_custom_call.1}
  #allocation0 [shape = 'u32[]', space=smem, size = 0x4, offset = 0x4, fixed_abs, tag = 'smem constant byte address 0x4 - core index']
  #allocation1 [shape = 'u32[72,128]{1,0:T(1,128)}', space=vmem, size = 0x9000, scoped, tag = 'internal scratch']
  #allocation2 [shape = 'f32[1]{0:T(128)S(6)}', space=smem, size = 0x200, scoped, tag = 'scoped memory for tpu_custom_call.1']
  %s0 = inlined_call_operand.hbm [shape: f32[8,384], index: 0, kind: input, shape index: {}]
  %s1 = inlined_call_operand.hbm [shape: f32[8,384], index: 1, kind: input, shape index: {}]
  %s2 = inlined_call_operand.hbm [shape: f32[1,768], index: 2, kind: input, shape index: {}]
  %s3 = inlined_call_operand.<no memory space> [shape: f32[1], index: 3, kind: input, shape index: {}]
  %s4 = inlined_call_operand.hbm [shape: f32[1,8], index: 4, kind: output, shape index: {}]
  %s5 = sld [smem:[#allocation0]]
  $region38: #{tpu_custom_call.1} parent=0
    _
  %s7 = ssub.s32 1, %s5
  %s8 = scalar_select 0, %s7, %s5
  %9 = sst [smem:[#allocation2]] %s3
  $region1: #{tpu_custom_call.1} parent=0
    #allocation3 [shape = 'u8[12288]{0}', space=vmem, size = 0x3000, scoped, tag = 'input window, operand 0, single buffered']
    #allocation4 [shape = 's32[1]{0}', space=sflag, size = 0x4, scoped, tag = 'scoped memory for tpu_custom_call.1']
    #allocation5 [shape = 's32[1]{0}', space=sflag, size = 0x4, scoped, tag = 'scoped memory for tpu_custom_call.1']
    #allocation6 [shape = 'u8[12288]{0}', space=vmem, size = 0x3000, scoped, tag = 'input window, operand 1, single buffered']
    #allocation7 [shape = 's32[1]{0}', space=sflag, size = 0x4, scoped, tag = 'scoped memory for tpu_custom_call.1']
    #allocation8 [shape = 'u8[3072]{0}', space=vmem, size = 0xc00, scoped, tag = 'input window, operand 2, single buffered']
    #allocation9 [shape = 'u8[512]{0}', space=vmem, size = 0x400, scoped, tag = 'output window, operand 0, single buffered']
    %10 = vsyncpa [#allocation4], 0
    %11 = vsyncpa [#allocation7], 0
    %12 = vsyncpa [#allocation5], 0
    // Predicated region
    $region2: #{tpu_custom_call.1} parent=1 // pred_check
      _
    $region3: #{tpu_custom_call.1} parent=1 // pred_check_branch
      %14 = sbr.rel (0) target = $region5
    $region4: #{tpu_custom_call.1} parent=1 // pred_region
      %16 = vsyncadd [#allocation4], 0
      %s18 = sshll.u32 %s0, 4
      %s19 = int_to_ptr.hbm [resolvable:$true] %s18
      %s20 = sshll.u32 [#allocation3], 4
      %s21 = int_to_ptr.vmem [resolvable:$true] %s20
      %23 = dma.hbm_to_vmem [thread:$0]  %s19, 384, %s21, [#allocation4]
    $region5: #{tpu_custom_call.1} parent=1 // pred_fallthru
      _
    // Predicated region
    $region6: #{tpu_custom_call.1} parent=1 // pred_check
      _
    $region7: #{tpu_custom_call.1} parent=1 // pred_check_branch
      %25 = sbr.rel (0) target = $region9
    $region8: #{tpu_custom_call.1} parent=1 // pred_region
      %27 = vsyncadd [#allocation7], 0
      %s29 = sshll.u32 %s1, 4
      %s30 = int_to_ptr.hbm [resolvable:$true] %s29
      %s31 = sshll.u32 [#allocation6], 4
      %s32 = int_to_ptr.vmem [resolvable:$true] %s31
      %34 = dma.hbm_to_vmem [thread:$0]  %s30, 384, %s32, [#allocation7]
    $region9: #{tpu_custom_call.1} parent=1 // pred_fallthru
      _
    // Predicated region
    $region10: #{tpu_custom_call.1} parent=1 // pred_check
      _
    $region11: #{tpu_custom_call.1} parent=1 // pred_check_branch
      %36 = sbr.rel (0) target = $region13
    $region12: #{tpu_custom_call.1} parent=1 // pred_region
      %38 = vsyncadd [#allocation7], 0
      %s40 = sshll.u32 %s2, 4
      %s41 = int_to_ptr.hbm [resolvable:$true] %s40
      %s42 = sshll.u32 [#allocation8], 4
      %s43 = int_to_ptr.vmem [resolvable:$true] %s42
      %45 = dma.hbm_to_vmem [thread:$0]  %s41, 96, %s43, [#allocation7]
    $region13: #{tpu_custom_call.1} parent=1 // pred_fallthru
      _
    // Predicated region
    $region14: #{tpu_custom_call.1} parent=1 // pred_check
      _
    $region15: #{tpu_custom_call.1} parent=1 // pred_check_branch
      %47 = sbr.rel (0) target = $region17
    $region16: #{tpu_custom_call.1} parent=1 // pred_region
      _
    $region17: #{tpu_custom_call.1} parent=1 // pred_fallthru
      _
    // Predicated region
    $region18: #{tpu_custom_call.1} parent=1 // pred_check
      _
    $region19: #{tpu_custom_call.1} parent=1 // pred_check_branch
      %49 = sbr.rel (0) target = $region21
    $region20: #{tpu_custom_call.1} parent=1 // pred_region
      %51 = dma.done [#allocation4], 384
    $region21: #{tpu_custom_call.1} parent=1 // pred_fallthru
      _
    // Predicated region
    $region22: #{tpu_custom_call.1} parent=1 // pred_check
      _
    $region23: #{tpu_custom_call.1} parent=1 // pred_check_branch
      %53 = sbr.rel (0) target = $region25
    $region24: #{tpu_custom_call.1} parent=1 // pred_region
      %55 = dma.done [#allocation7], 384
    $region25: #{tpu_custom_call.1} parent=1 // pred_fallthru
      _
    // Predicated region
    $region26: #{tpu_custom_call.1} parent=1 // pred_check
      _
    $region27: #{tpu_custom_call.1} parent=1 // pred_check_branch
      %57 = sbr.rel (0) target = $region29
    $region28: #{tpu_custom_call.1} parent=1 // pred_region
      %59 = dma.done [#allocation7], 96
    $region29: #{tpu_custom_call.1} parent=1 // pred_fallthru
      _
    %v60 = vld [vmem:[#allocation3] sm:$0xff]
    %v61 = vld [vmem:[#allocation3 + $0x8] sm:$0xff]
    %v62 = vld [vmem:[#allocation3 + $0x10] sm:$0xff]
    %v63 = vld [vmem:[#allocation6] sm:$0xff]
    %v64 = vld [vmem:[#allocation6 + $0x8] sm:$0xff]
    %v65 = vld [vmem:[#allocation6 + $0x10] sm:$0xff]
    %v66 = vld [vmem:[#allocation8] sm:$0x7]
    %v67 = vld [vmem:[#allocation8 + $0x3] sm:$0x7]
    %v69 = vperm.slane %v66, 0
    %v70 = vperm.slane %v66, 1
    %v71 = vperm.slane %v66, 2
    %v75 = vmul.f32 %v60, %v69
    %v76 = vmul.f32 %v61, %v70
    %v77 = vmul.f32 %v62, %v71
    %v79 = vperm.slane %v67, 0
    %v80 = vperm.slane %v67, 1
    %v81 = vperm.slane %v67, 2
    %v85 = vmul.f32 %v63, %v79
    %v86 = vmul.f32 %v64, %v80
    %v87 = vmul.f32 %v65, %v81
    %v88 = vadd.f32 %v75, %v85
    %v89 = vadd.f32 %v76, %v86
    %v90 = vadd.f32 %v77, %v87
    %v91 = vadd.f32 %v88, %v89
    %v92 = vadd.f32 %v91, %v90
    %93 = vadd.xlane.f32.xlu0 %v92
    %v94 = vpop.xlane.xlu0 %93
    %s95 = sld [smem:[#allocation2]]
    %v96 = vstv %s95
    %v97 = vadd.f32 %v94, %v96
    %v99 = vlaneseq
    %v100 = vand.u32 %v99, 127
    %v101 = vperm.slane %v97, %v100
    %vm103 = vcmask 57344
    %104 = vst.msk [vmem:[#allocation9] sm:$0x1] %vm103, %v101
    // Predicated region
    $region30: #{tpu_custom_call.1} parent=1 // pred_check
      _
    $region31: #{tpu_custom_call.1} parent=1 // pred_check_branch
      %106 = sbr.rel (0) target = $region33
    $region32: #{tpu_custom_call.1} parent=1 // pred_region
      %108 = vsyncadd [#allocation5], 0
      %s110 = sshll.u32 [#allocation9], 4
      %s111 = int_to_ptr.vmem [resolvable:$true] %s110
      %s112 = sshll.u32 %s4, 4
      %s113 = int_to_ptr.hbm [resolvable:$true] %s112
      %115 = dma.vmem_to_hbm [thread:$0]  %s111, 16, %s113, [#allocation5]
    $region33: #{tpu_custom_call.1} parent=1 // pred_fallthru
      _
    // Predicated region
    $region34: #{tpu_custom_call.1} parent=1 // pred_check
      _
    $region35: #{tpu_custom_call.1} parent=1 // pred_check_branch
      %117 = sbr.rel (0) target = $region37
    $region36: #{tpu_custom_call.1} parent=1 // pred_region
      %119 = dma.done [#allocation5], 16
    $region37: #{tpu_custom_call.1} parent=1 // pred_fallthru
      _
    %120 = vsyncpa [#allocation4], 1
    %121 = vsyncpa [#allocation7], 1
    %122 = vsyncpa [#allocation5], 1

</llo_original>
